<compile_context>
chip_gen: v7x
topology: tpu7x:2x2x1
jax: 0.10.0
libtpu: 0.0.40
codegen_flags: <defaults>
</compile_context>

<pallas_src>
import functools
import math

import jax
import jax.numpy as jnp
from jax.experimental import pallas as pl
from jax.experimental.pallas import tpu as pltpu

# Scoped-VMEM cap; kernel working sets here are only tens of KB, this is just a ceiling
# that is safe on v5e/v6e (128 MiB) and v7x (64 MiB).
VMEM_LIMIT_BYTES = 48 * 1024 * 1024


def _cparams(n_grid_axes):
    return pltpu.CompilerParams(
        dimension_semantics=("parallel",) * n_grid_axes,
        vmem_limit_bytes=VMEM_LIMIT_BYTES,
    )


# ---------------------------------------------------------------------------
# exact erf-GELU (PyTorch nn.GELU default) built from EUP-friendly primitives
# ---------------------------------------------------------------------------
def _gelu_erf(x):
    # Abramowitz & Stegun 7.1.26 erf approximation, |err| < 1.5e-7 (far below bf16).
    z = x * 0.7071067811865476
    az = jnp.abs(z)
    t = pl.reciprocal(1.0 + 0.3275911 * az, approx=True)
    poly = t * (0.254829592 + t * (-0.284496736 + t * (1.421413741
                + t * (-1.453152027 + t * 1.061405429))))
    erf_abs = 1.0 - poly * jnp.exp(-az * az)
    erf = jnp.where(z >= 0.0, erf_abs, -erf_abs)
    return x * 0.5 * (1.0 + erf)


# ---------------------------------------------------------------------------
# Fused conv (+bias +LayerNorm/GELU or +InstanceNorm/LeakyReLU) kernel
#   inputs  : 1..n flat padded images, channel-major (1, Cp_i, Hp*Wp) bf16
#   weight  : (Cout, K) bf16 with K = kh*kw*sum(Cp_i)  (tap-major, channel-minor)
#   output  : (1, Cout, Ho*Wp)  -- Ho*Wp is a multiple of 128 (lane-dense store)
# ---------------------------------------------------------------------------
def _conv_fused_kernel(*refs, n_in, taps, Wp, Ho, Wo, post, eps, slope):
    x_refs = refs[:n_in]
    w_ref, b_ref, g_ref, bt_ref, o_ref = refs[n_in:]
    n_rows = Ho * Wp

    # Stack every tap of every input along the contracting dim -> one wide-K matmul.
    parts = []
    for x_ref in x_refs:
        for di, dj in taps:
            start = di * Wp + dj                      # static python int
            parts.append(x_ref[0, :, start:start + n_rows])   # (Cp_i, n_rows) bf16
    a = jnp.concatenate(parts, axis=0)                # (K, n_rows)
    acc = jnp.dot(w_ref[...], a, preferred_element_type=jnp.float32)  # (Cout, n_rows)
    acc = acc + b_ref[...]                            # bias (Cout, 1)

    if post in ("ln", "ln_gelu"):
        # LayerNorm over channels (sublane reduce over Cout)
        mu = jnp.mean(acc, axis=0, keepdims=True)
        var = jnp.mean(jnp.square(acc - mu), axis=0, keepdims=True)
        acc = (acc - mu) * jax.lax.rsqrt(var + eps)
        acc = acc * g_ref[...] + bt_ref[...]
        if post == "ln_gelu":
            acc = _gelu_erf(acc)
    elif post == "in_lrelu":
        # InstanceNorm over the valid spatial positions; validity mask via iota
        lane = jax.lax.broadcasted_iota(jnp.int32, (1, n_rows), 1)
        msk = ((lane % Wp) < Wo).astype(jnp.float32)
        inv_cnt = 1.0 / float(Ho * Wo)
        mu = jnp.sum(acc * msk, axis=1, keepdims=True) * inv_cnt
        var = jnp.sum(jnp.square(acc - mu) * msk, axis=1, keepdims=True) * inv_cnt
        y = (acc - mu) * jax.lax.rsqrt(var + eps)
        y = y * g_ref[...] + bt_ref[...]
        acc = jnp.where(y >= 0.0, y, slope * y)

    o_ref[0] = acc.astype(o_ref.dtype)


def _stride2_weight(w):
    """Map a 3x3 / stride-2 / pad-1 conv weight to the equivalent 2x2 stride-1 conv
    weight acting on the 2x2 space-to-depth (phase) representation of the input."""
    kh, kw, cin, cout = w.shape
    w2 = jnp.zeros((2, 2, 4 * cin, cout), w.dtype)
    for ka in range(2):
        for kb in range(2):
            for p in range(2):
                for q in range(2):
                    di = 2 * (ka - 1) + p + 1
                    dj = 2 * (kb - 1) + q + 1
                    if 0 <= di < kh and 0 <= dj < kw:
                        c0 = (p * 2 + q) * cin
                        w2 = w2.at[ka, kb, c0:c0 + cin, :].set(w[di, dj])
    return w2


def conv2d_fused(xs, w, b, *, stride, post=None, gamma=None, beta=None,
                 out_dtype=jnp.bfloat16, eps=1e-5, slope=0.01):
    """3x3 conv, padding=1, stride in {1,2}. xs: NCHW array or list of NCHW arrays
    (implicit channel concat); w: (3,3,sumCin,Cout)."""
    if not isinstance(xs, (list, tuple)):
        xs = [xs]
    B, _, H, W = xs[0].shape
    Cout = w.shape[-1]
    cins = [int(x.shape[1]) for x in xs]
    assert sum(cins) == w.shape[2]

    if stride == 1:
        Ho, Wo = H, W
        kk = 3
        extra_rows = 3     # 1 top zero pad + 1 bottom zero pad + 1 slack row
        need = Wo + 2      # left zero col + data + at least one right zero col
    elif stride == 2:
        assert H % 2 == 0 and W % 2 == 0
        Ho, Wo = H // 2, W // 2
        kk = 2
        extra_rows = 2     # 1 top zero pad + 1 slack row
        need = Wo + 1      # left zero col + data (no right pad needed)
    else:
        raise ValueError("stride must be 1 or 2")
    taps = tuple((di, dj) for di in range(kk) for dj in range(kk))

    # Lane-dense output: padded width Wp chosen so Ho*Wp is a multiple of 128.
    g = 128 // math.gcd(Ho, 128)
    Wp = ((need + g - 1) // g) * g
    Hp = Ho + extra_rows
    n_rows = Ho * Wp

    slabs, wparts, cps, coff = [], [], [], 0
    for x, cin in zip(xs, cins):
        wch = w[:, :, coff:coff + cin, :]
        coff += cin
        if stride == 2:
            # space-to-depth: channel index (p*2+q)*cin + c, matches _stride2_weight
            img = x.reshape(B, cin, Ho, 2, Wo, 2).transpose(0, 3, 5, 1, 2, 4)
            img = img.reshape(B, 4 * cin, Ho, Wo)
            wch = _stride2_weight(wch)
            cp = 4 * cin
        else:
            img, cp = x, cin
        xp = jnp.pad(img.astype(jnp.bfloat16),
                     ((0, 0), (0, 0), (1, Hp - Ho - 1), (1, Wp - Wo - 1)))
        slabs.append(xp.reshape(B, cp, Hp * Wp))
        wparts.append(jnp.transpose(wch, (3, 0, 1, 2)).reshape(Cout, -1))
        cps.append(cp)

    Wt = jnp.concatenate(wparts, axis=1).astype(jnp.bfloat16)
    K = kk * kk * sum(cps)
    bcol = b.reshape(Cout, 1).astype(jnp.float32)
    gcol = (jnp.ones((Cout,), jnp.float32) if gamma is None else gamma
            ).reshape(Cout, 1).astype(jnp.float32)
    btcol = (jnp.zeros((Cout,), jnp.float32) if beta is None else beta
             ).reshape(Cout, 1).astype(jnp.float32)

    in_specs = [pl.BlockSpec((1, cp, Hp * Wp), lambda i: (i, 0, 0)) for cp in cps]
    in_specs += [
        pl.BlockSpec((Cout, K), lambda i: (0, 0)),
        pl.BlockSpec((Cout, 1), lambda i: (0, 0)),
        pl.BlockSpec((Cout, 1), lambda i: (0, 0)),
        pl.BlockSpec((Cout, 1), lambda i: (0, 0)),
    ]
    out = pl.pallas_call(
        functools.partial(_conv_fused_kernel, n_in=len(slabs), taps=taps,
                          Wp=Wp, Ho=Ho, Wo=Wo, post=post, eps=eps, slope=slope),
        out_shape=jax.ShapeDtypeStruct((B, Cout, n_rows), out_dtype),
        grid=(B,),
        in_specs=in_specs,
        out_specs=pl.BlockSpec((1, Cout, n_rows), lambda i: (i, 0, 0)),
        compiler_params=_cparams(1),
    )(*slabs, Wt, bcol, gcol, btcol)
    # one cheap XLA pass: drop the right-side pad/garbage columns
    return out.reshape(B, Cout, Ho, Wp)[:, :, :, :Wo]


# ---------------------------------------------------------------------------
# ConvTranspose2d (kernel_size == stride): one batch-folded matmul kernel
#   out (N, B*H*W) = W (N, Cin) @ x (Cin, B*H*W),  N = Cout*k*k
# ---------------------------------------------------------------------------
def _transpconv_kernel(x_ref, w_ref, b_ref, o_ref):
    o = jnp.dot(w_ref[...], x_ref[...], preferred_element_type=jnp.float32) + b_ref[...]
    o_ref[...] = o.astype(o_ref.dtype)


def convtranspose_fused(x, w, b, *, out_dtype=jnp.bfloat16):
    """x:(B,Cin,H,W), w:(Cin,Cout,k,k) with kernel==stride==k -> (B,Cout,H*k,W*k)."""
    B, Cin, H, W = x.shape
    _, Cout, kh, kw = w.shape
    N = Cout * kh * kw
    M = B * H * W
    xt = jnp.transpose(x, (1, 0, 2, 3)).reshape(Cin, M).astype(jnp.bfloat16)
    Wm = jnp.transpose(w, (1, 2, 3, 0)).reshape(N, Cin).astype(jnp.bfloat16)
    bcol = jnp.repeat(b.astype(jnp.float32), kh * kw).reshape(N, 1)

    out = pl.pallas_call(
        _transpconv_kernel,
        out_shape=jax.ShapeDtypeStruct((N, M), out_dtype),
        grid=(1,),
        in_specs=[
            pl.BlockSpec((Cin, M), lambda i: (0, 0)),
            pl.BlockSpec((N, Cin), lambda i: (0, 0)),
            pl.BlockSpec((N, 1), lambda i: (0, 0)),
        ],
        out_specs=pl.BlockSpec((N, M), lambda i: (0, 0)),
        compiler_params=_cparams(1),
    )(xt, Wm, bcol)
    # TODO(synk): the (k,k) -> (H*k, W*k) scatter stays as one XLA relayout pass.
    out = out.reshape(Cout, kh, kw, B, H, W)
    out = jnp.transpose(out, (3, 0, 4, 1, 5, 2)).reshape(B, Cout, H * kh, W * kw)
    return out


# ---------------------------------------------------------------------------
# Soft data-consistency: single lane-dense (B*C, H*W) elementwise block
# ---------------------------------------------------------------------------
def _dc_kernel(kr_ref, ki_ref, m_ref, k0r_ref, k0i_ref, w_ref, or_ref, oi_ref):
    w = w_ref[0]
    mw = m_ref[...] * w
    kr = kr_ref[...]
    ki = ki_ref[...]
    # (1-m)*k + m*k*(1-w) + m*k0*w  ==  k + m*w*(k0 - k)
    or_ref[...] = kr + mw * (k0r_ref[...] - kr)
    oi_ref[...] = ki + mw * (k0i_ref[...] - ki)


def dc_layer_soft(k_rec, mask, k_ref, dc_weight):
    B, C, H, W = k_rec.shape
    R, L = B * C, H * W
    kr = jnp.real(k_rec).astype(jnp.float32).reshape(R, L)
    ki = jnp.imag(k_rec).astype(jnp.float32).reshape(R, L)
    k0r = jnp.real(k_ref).astype(jnp.float32).reshape(R, L)
    k0i = jnp.imag(k_ref).astype(jnp.float32).reshape(R, L)
    mm = mask.astype(jnp.float32).reshape(R, L)
    wv = dc_weight.reshape(1).astype(jnp.float32)

    blk = pl.BlockSpec((R, L), lambda i: (0, 0))
    o_r, o_i = pl.pallas_call(
        _dc_kernel,
        out_shape=(jax.ShapeDtypeStruct((R, L), jnp.float32),
                   jax.ShapeDtypeStruct((R, L), jnp.float32)),
        grid=(1,),
        in_specs=[blk, blk, blk, blk, blk,
                  pl.BlockSpec(memory_space=pltpu.MemorySpace.SMEM)],
        out_specs=(blk, blk),
        compiler_params=_cparams(1),
    )(kr, ki, mm, k0r, k0i, wv)
    return jax.lax.complex(o_r, o_i).reshape(B, C, H, W)


# ---------------------------------------------------------------------------
# Parameters (deterministic synthetic init)
# ---------------------------------------------------------------------------
def init_params(key, cfg):
    f = cfg["features"]
    Cin = cfg["input_channels"]
    dm = cfg["d_model"]
    ps = cfg["patch_size"]
    n_stages = cfg["n_stages"]
    keys = iter(jax.random.split(key, 128))

    def w(shape, scale=0.1):
        return scale * jax.random.normal(next(keys), shape, jnp.float32)

    p = {}
    f0 = f[0]
    # encoder stage 0: patch embed v2 (conv s2 -> LN -> GELU -> conv s2 -> LN)
    p["pe1_w"] = w((3, 3, Cin, f0 // 2)); p["pe1_b"] = w((f0 // 2,))
    p["ln1_g"] = jnp.ones((f0 // 2,), jnp.float32); p["ln1_b"] = jnp.zeros((f0 // 2,), jnp.float32)
    p["pe2_w"] = w((3, 3, f0 // 2, f0)); p["pe2_b"] = w((f0,))
    p["ln2_g"] = jnp.ones((f0,), jnp.float32); p["ln2_b"] = jnp.zeros((f0,), jnp.float32)
    # encoder downsampling convs (stages s>=1)
    for s in range(1, n_stages):
        p[f"enc{s}_w"] = w((3, 3, f[s - 1], f[s])); p[f"enc{s}_b"] = w((f[s],))
    # decoder: transpconv + StackedConvBlocks(conv3x3 -> InstanceNorm(affine) -> LeakyReLU)
    for s in range(n_stages - 1):
        below = f[-(s + 1)]
        skip = f[-(s + 2)]
        k = cfg["strides"][-(s + 1)]
        p[f"dec{s}_tw"] = w((below, skip, k, k)); p[f"dec{s}_tb"] = w((skip,))
        p[f"dec{s}_cw"] = w((3, 3, 2 * skip, skip)); p[f"dec{s}_cb"] = w((skip,))
        p[f"dec{s}_ing"] = jnp.ones((skip,), jnp.float32)
        p[f"dec{s}_inb"] = jnp.zeros((skip,), jnp.float32)
    # patch_expand: ConvTranspose2d(d_model -> input_channels, k=patch_size, s=patch_size)
    p["pexp_w"] = w((dm, Cin, ps, ps)); p["pexp_b"] = w((Cin,))
    # soft DC weight, initialized as torch.Tensor([1])
    p["dc_weight"] = jnp.ones((1,), jnp.float32)
    return p


# ---------------------------------------------------------------------------
# VSSMUNet forward (DC_type='AM', out_put=False, sens/post/iz_rec2 = None)
# ---------------------------------------------------------------------------
def vssm_unet_forward(params, uk, mask, uk0, cfg):
    p = params
    n_stages = cfg["n_stages"]
    strides = cfg["strides"]

    # ----- apply_model -----
    # TODO(synk): `ifft`/`fft` helpers are not defined in the reference module;
    # using an orthonormal, unshifted 2D FFT over the last two dims as the convention.
    x = jnp.real(jnp.fft.ifft2(uk, axes=(-2, -1), norm="ortho")).astype(jnp.float32)

    # self.norm (per-batch mean/std over C*H*W, unbiased std like torch.std)
    B = x.shape[0]
    flat = x.reshape(B, -1)
    mean = jnp.mean(flat, axis=1)
    std = jnp.std(flat, axis=1, ddof=1)
    xn = (x - mean[:, None, None, None]) / std[:, None, None, None]   # stays NCHW

    # ----- encoder (VSSM_Encoder, post=None) -----
    h = conv2d_fused(xn, p["pe1_w"], p["pe1_b"], stride=2, post="ln_gelu",
                     gamma=p["ln1_g"], beta=p["ln1_b"])
    h = conv2d_fused(h, p["pe2_w"], p["pe2_b"], stride=2, post="ln",
                     gamma=p["ln2_g"], beta=p["ln2_b"])
    skips = [h]
    # TODO(synk): VSSBlock (SS2D selective scan) is not defined in the reference snippet; identity.
    skips.append(h)
    for s in range(1, n_stages):
        h = conv2d_fused(h, p[f"enc{s}_w"], p[f"enc{s}_b"], stride=strides[s], post=None)
        skips.append(h)   # VSSBlocks -> identity (see TODO above)

    # ----- decoder: transpconv + (split-weight fused conv -> IN -> LeakyReLU) -----
    lres = skips[-1]
    for s in range(n_stages - 1):
        x_up = convtranspose_fused(lres, p[f"dec{s}_tw"], p[f"dec{s}_tb"])
        skip = skips[-(s + 2)]
        lres = conv2d_fused([x_up, skip], p[f"dec{s}_cw"], p[f"dec{s}_cb"], stride=1,
                            post="in_lrelu", gamma=p[f"dec{s}_ing"], beta=p[f"dec{s}_inb"])

    # patch_expand + unnorm + fft
    y = convtranspose_fused(lres, p["pexp_w"], p["pexp_b"], out_dtype=jnp.float32)
    y = y * std[:, None, None, None] + mean[:, None, None, None]
    Gk = jnp.fft.fft2(y, axes=(-2, -1), norm="ortho")

    # ----- DC (DC_type == 'AM', soft) -----
    return dc_layer_soft(uk + Gk, mask, uk0, p["dc_weight"])


# ---------------------------------------------------------------------------
if __name__ == "__main__":
    cfg = dict(
        input_channels=2,
        patch_size=4,
        d_model=8,               # must equal UNet_base_num_features (features[0])
        n_stages=3,
        features=[8, 16, 32],    # min(base * 2**i, max) with base=8, max=32
        strides=[1, 2, 2],
        padding=[1, 1, 1],
    )
    key = jax.random.PRNGKey(0)
    kp, k1, k2, k3, k4, km = jax.random.split(key, 6)
    params = init_params(kp, cfg)

    # ---- golden check: fused conv kernel vs XLA conv (stride 1, stride 2, dual-input) ----
    gk = jax.random.split(jax.random.PRNGKey(1), 5)
    xt = jax.random.normal(gk[0], (2, 6, 16, 16), jnp.float32)
    wt = 0.1 * jax.random.normal(gk[1], (3, 3, 6, 8), jnp.float32)
    bt = 0.1 * jax.random.normal(gk[2], (8,), jnp.float32)
    dn = ("NCHW", "HWIO", "NCHW")
    ref1 = jax.lax.conv_general_dilated(xt, wt, (1, 1), ((1, 1), (1, 1)),
                                        dimension_numbers=dn) + bt[None, :, None, None]
    got1 = conv2d_fused(xt, wt, bt, stride=1, post=None, out_dtype=jnp.float32)
    assert float(jnp.max(jnp.abs(ref1 - got1))) < 5e-2, "stride-1 conv mismatch"
    ref2 = jax.lax.conv_general_dilated(xt, wt, (2, 2), ((1, 1), (1, 1)),
                                        dimension_numbers=dn) + bt[None, :, None, None]
    got2 = conv2d_fused(xt, wt, bt, stride=2, post=None, out_dtype=jnp.float32)
    assert float(jnp.max(jnp.abs(ref2 - got2))) < 5e-2, "stride-2 conv mismatch"
    x2 = jax.random.normal(gk[3], (2, 6, 16, 16), jnp.float32)
    wt2 = 0.1 * jax.random.normal(gk[4], (3, 3, 12, 8), jnp.float32)
    ref3 = jax.lax.conv_general_dilated(jnp.concatenate([xt, x2], axis=1), wt2, (1, 1),
                                        ((1, 1), (1, 1)), dimension_numbers=dn) \
        + bt[None, :, None, None]
    got3 = conv2d_fused([xt, x2], wt2, bt, stride=1, post=None, out_dtype=jnp.float32)
    assert float(jnp.max(jnp.abs(ref3 - got3))) < 5e-2, "dual-input conv mismatch"

    # ---- full forward ----
    B, C, H, W = 2, cfg["input_channels"], 32, 32
    uk = (jax.random.normal(k1, (B, C, H, W)) +
          1j * jax.random.normal(k2, (B, C, H, W))).astype(jnp.complex64)
    uk0 = (jax.random.normal(k3, (B, C, H, W)) +
           1j * jax.random.normal(k4, (B, C, H, W))).astype(jnp.complex64)
    mask = (jax.random.uniform(km, (B, C, H, W)) > 0.5).astype(jnp.float32)

    fwd = jax.jit(functools.partial(vssm_unet_forward, cfg=cfg))
    k_out = fwd(params, uk, mask, uk0)
    jax.block_until_ready(k_out)

    assert k_out.shape == (B, C, H, W), k_out.shape
    assert k_out.dtype == jnp.complex64, k_out.dtype
    assert bool(jnp.all(jnp.isfinite(jnp.real(k_out))))
    assert bool(jnp.all(jnp.isfinite(jnp.imag(k_out))))
    print("KERNEL_OK")
</pallas_src>

<mosaic_0001>
module attributes {stable_mosaic.version = 11 : i64} {
  func.func @_conv_fused_kernel(%arg0: i32, %arg1: memref<1x6x456xbf16, #tpu.memory_space<vmem>>, %arg2: memref<8x54xbf16, #tpu.memory_space<vmem>>, %arg3: memref<8x1xf32, #tpu.memory_space<vmem>>, %arg4: memref<8x1xf32, #tpu.memory_space<vmem>>, %arg5: memref<8x1xf32, #tpu.memory_space<vmem>>, %arg6: memref<1x8x384xf32, #tpu.memory_space<vmem>>) attributes {dimension_semantics = [#tpu.dimension_semantics<parallel>], iteration_bounds = array<i64: 2>, scalar_prefetch = 0 : i64, scratch_operands = 0 : i64, tpu.core_type = #tpu.core_type<tc>, window_params = [{transform_indices = @transform_0, window_bounds = array<i64: 1, 6, 456>}, {pipeline_mode = #tpu.pipeline_mode<synchronous>, transform_indices = @transform_1, window_bounds = array<i64: 8, 54>}, {pipeline_mode = #tpu.pipeline_mode<synchronous>, transform_indices = @transform_2, window_bounds = array<i64: 8, 1>}, {pipeline_mode = #tpu.pipeline_mode<synchronous>, transform_indices = @transform_3, window_bounds = array<i64: 8, 1>}, {pipeline_mode = #tpu.pipeline_mode<synchronous>, transform_indices = @transform_4, window_bounds = array<i64: 8, 1>}, {transform_indices = @transform_5, window_bounds = array<i64: 1, 8, 384>}]} {
    %c0 = arith.constant 0 : index
    %c0_0 = arith.constant 0 : index
    %c0_1 = arith.constant 0 : index
    %0 = vector.load %arg1[%c0, %c0_0, %c0_1] : memref<1x6x456xbf16, #tpu.memory_space<vmem>>, vector<1x6x384xbf16>
    %1 = vector.shape_cast %0 : vector<1x6x384xbf16> to vector<6x384xbf16>
    %c0_2 = arith.constant 0 : index
    %c0_3 = arith.constant 0 : index
    %c1 = arith.constant 1 : index
    %2 = vector.load %arg1[%c0_2, %c0_3, %c1] : memref<1x6x456xbf16, #tpu.memory_space<vmem>>, vector<1x6x384xbf16>
    %3 = vector.shape_cast %2 : vector<1x6x384xbf16> to vector<6x384xbf16>
    %c0_4 = arith.constant 0 : index
    %c0_5 = arith.constant 0 : index
    %c2 = arith.constant 2 : index
    %4 = vector.load %arg1[%c0_4, %c0_5, %c2] : memref<1x6x456xbf16, #tpu.memory_space<vmem>>, vector<1x6x384xbf16>
    %5 = vector.shape_cast %4 : vector<1x6x384xbf16> to vector<6x384xbf16>
    %c0_6 = arith.constant 0 : index
    %c0_7 = arith.constant 0 : index
    %c24 = arith.constant 24 : index
    %6 = vector.load %arg1[%c0_6, %c0_7, %c24] : memref<1x6x456xbf16, #tpu.memory_space<vmem>>, vector<1x6x384xbf16>
    %7 = vector.shape_cast %6 : vector<1x6x384xbf16> to vector<6x384xbf16>
    %c0_8 = arith.constant 0 : index
    %c0_9 = arith.constant 0 : index
    %c25 = arith.constant 25 : index
    %8 = vector.load %arg1[%c0_8, %c0_9, %c25] : memref<1x6x456xbf16, #tpu.memory_space<vmem>>, vector<1x6x384xbf16>
    %9 = vector.shape_cast %8 : vector<1x6x384xbf16> to vector<6x384xbf16>
    %c0_10 = arith.constant 0 : index
    %c0_11 = arith.constant 0 : index
    %c26 = arith.constant 26 : index
    %10 = vector.load %arg1[%c0_10, %c0_11, %c26] : memref<1x6x456xbf16, #tpu.memory_space<vmem>>, vector<1x6x384xbf16>
    %11 = vector.shape_cast %10 : vector<1x6x384xbf16> to vector<6x384xbf16>
    %c0_12 = arith.constant 0 : index
    %c0_13 = arith.constant 0 : index
    %c48 = arith.constant 48 : index
    %12 = vector.load %arg1[%c0_12, %c0_13, %c48] : memref<1x6x456xbf16, #tpu.memory_space<vmem>>, vector<1x6x384xbf16>
    %13 = vector.shape_cast %12 : vector<1x6x384xbf16> to vector<6x384xbf16>
    %c0_14 = arith.constant 0 : index
    %c0_15 = arith.constant 0 : index
    %c49 = arith.constant 49 : index
    %14 = vector.load %arg1[%c0_14, %c0_15, %c49] : memref<1x6x456xbf16, #tpu.memory_space<vmem>>, vector<1x6x384xbf16>
    %15 = vector.shape_cast %14 : vector<1x6x384xbf16> to vector<6x384xbf16>
    %c0_16 = arith.constant 0 : index
    %c0_17 = arith.constant 0 : index
    %c50 = arith.constant 50 : index
    %16 = vector.load %arg1[%c0_16, %c0_17, %c50] : memref<1x6x456xbf16, #tpu.memory_space<vmem>>, vector<1x6x384xbf16>
    %17 = vector.shape_cast %16 : vector<1x6x384xbf16> to vector<6x384xbf16>
    %18 = tpu.concatenate %1, %3, %5, %7, %9, %11, %13, %15, %17 in 0 : vector<6x384xbf16>, vector<6x384xbf16>, vector<6x384xbf16>, vector<6x384xbf16>, vector<6x384xbf16>, vector<6x384xbf16>, vector<6x384xbf16>, vector<6x384xbf16>, vector<6x384xbf16> -> vector<54x384xbf16>
    %c0_18 = arith.constant 0 : index
    %c0_19 = arith.constant 0 : index
    %19 = vector.load %arg2[%c0_18, %c0_19] : memref<8x54xbf16, #tpu.memory_space<vmem>>, vector<8x54xbf16>
    %cst = arith.constant dense<0.000000e+00> : vector<8x384xf32>
    %20 = tpu.matmul %19, %18, %cst {dimension_numbers = #tpu.dot_dimension_numbers<[1], [0], [0], [1], [0, 0, 1, 1], [], []>} : vector<8x54xbf16>, vector<54x384xbf16>, vector<8x384xf32> -> vector<8x384xf32>
    %c0_20 = arith.constant 0 : index
    %c0_21 = arith.constant 0 : index
    %21 = vector.load %arg3[%c0_20, %c0_21] : memref<8x1xf32, #tpu.memory_space<vmem>>, vector<8x1xf32>
    %22 = vector.broadcast %21 : vector<8x1xf32> to vector<8x384xf32>
    %23 = arith.addf %20, %22 : vector<8x384xf32>
    %c0_22 = arith.constant 0 : index
    %c0_23 = arith.constant 0 : index
    %c0_24 = arith.constant 0 : index
    %24 = vector.load %arg6[%c0_22, %c0_23, %c0_24] : memref<1x8x384xf32, #tpu.memory_space<vmem>>, vector<1x8x384xf32>
    %25 = vector.shape_cast %24 : vector<1x8x384xf32> to vector<8x384xf32>
    %26 = vector.shape_cast %23 : vector<8x384xf32> to vector<1x8x384xf32>
    tpu.vector_store %arg6[%c0_22, %c0_23, %c0_24], %26 {strides = array<i32>} : memref<1x8x384xf32, #tpu.memory_space<vmem>>, vector<1x8x384xf32>,
    return
  }
  func.func @transform_0(%arg0: i32) -> (i32, i32, i32) {
    %c0_i32 = arith.constant 0 : i32
    %c0_i32_0 = arith.constant 0 : i32
    %c0_i32_1 = arith.constant 0 : i32
    return %arg0, %c0_i32, %c0_i32_0 : i32, i32, i32
  }
  func.func @transform_1(%arg0: i32) -> (i32, i32) {
    %c0_i32 = arith.constant 0 : i32
    %c0_i32_0 = arith.constant 0 : i32
    %c0_i32_1 = arith.constant 0 : i32
    return %c0_i32, %c0_i32_0 : i32, i32
  }
  func.func @transform_2(%arg0: i32) -> (i32, i32) {
    %c0_i32 = arith.constant 0 : i32
    %c0_i32_0 = arith.constant 0 : i32
    %c0_i32_1 = arith.constant 0 : i32
    return %c0_i32, %c0_i32_0 : i32, i32
  }
  func.func @transform_3(%arg0: i32) -> (i32, i32) {
    %c0_i32 = arith.constant 0 : i32
    %c0_i32_0 = arith.constant 0 : i32
    %c0_i32_1 = arith.constant 0 : i32
    return %c0_i32, %c0_i32_0 : i32, i32
  }
  func.func @transform_4(%arg0: i32) -> (i32, i32) {
    %c0_i32 = arith.constant 0 : i32
    %c0_i32_0 = arith.constant 0 : i32
    %c0_i32_1 = arith.constant 0 : i32
    return %c0_i32, %c0_i32_0 : i32, i32
  }
  func.func @transform_5(%arg0: i32) -> (i32, i32, i32) {
    %c0_i32 = arith.constant 0 : i32
    %c0_i32_0 = arith.constant 0 : i32
    %c0_i32_1 = arith.constant 0 : i32
    return %arg0, %c0_i32, %c0_i32_0 : i32, i32, i32
  }
}

</mosaic_0001>

<llo_original>
// kernel: tpu_custom_call.1
$region0: #{tpu_custom_call.1}
  #allocation0 [shape = 'u32[]', space=smem, size = 0x4, offset = 0x4, fixed_abs, tag = 'smem constant byte address 0x4 - core index']
  #allocation1 [shape = 'u32[144,128]{1,0:T(1,128)}', space=vmem, size = 0x12000, scoped, tag = 'internal scratch']
  %s0 = inlined_call_operand.vmem [shape: bf16[2,6,456], index: 0, kind: input, shape index: {}]
  %s1 = inlined_call_operand.vmem [shape: bf16[8,54], index: 1, kind: input, shape index: {}]
  %s2 = inlined_call_operand.vmem [shape: f32[8,1], index: 2, kind: input, shape index: {}]
  %s3 = inlined_call_operand.vmem [shape: f32[8,1], index: 3, kind: input, shape index: {}]
  %s4 = inlined_call_operand.vmem [shape: f32[8,1], index: 4, kind: input, shape index: {}]
  %s5 = inlined_call_operand.hbm [shape: f32[2,8,384], index: 5, kind: output, shape index: {}]
  %s6 = sld [smem:[#allocation0]]
  $region53: #{tpu_custom_call.1} parent=0
    _
  %s8 = ssub.s32 1, %s6
  %s9 = scalar_select 0, %s8, %s6
  $region1: #{tpu_custom_call.1} parent=0
    #allocation2 [shape = 'u8[24576]{0}', space=vmem, size = 0x6000, scoped, tag = 'output window, operand 0']
    #allocation3 [shape = 's32[2]{0}', space=sflag, size = 0x8, scoped, tag = 'scoped memory for tpu_custom_call.1']
    %10 = vsyncpa [#allocation3], 0
    %s11 = scalar_lea.sflag [#allocation3], 1
    %12 = vsyncpa %s11, 0
    loop: start=0, step=1, limit=4
    $region2: #{tpu_custom_call.1} parent=1 // loop_pre_header
      _
    $region3: #{tpu_custom_call.1} parent=1 // loop_header
      %s14 = sphi 0, %s18
      %p15 = scmp.ge.s32.totalorder %s14, 4
      %s24 = sphi 0, %s26
      %s27 = sphi 0, %s24
      %s28 = sphi 0, %s27
      %s44 = sphi 0, %s28
      %s48 = sphi 0, %s48
      %s50 = sphi 0, %s48
      %s51 = sphi 0, %s50
      %s65 = sphi 0, %s51
      %s69 = sphi 0, %s69
      %s71 = sphi 0, %s69
      %s72 = sphi 0, %s71
      %s86 = sphi 0, %s72
      %s90 = sphi 0, %s90
      %s92 = sphi 0, %s90
      %s93 = sphi 0, %s92
      %s107 = sphi 0, %s93
      %s111 = sphi 0, %s111
      %s113 = sphi 0, %s111
      %s114 = sphi 0, %s113
      %s128 = sphi 0, %s114
      %s134 = sphi 0, %s136
      %s137 = sphi 0, %s134
      %s138 = sphi 0, %s137
      %s154 = sphi 0, %s138
    $region4: #{tpu_custom_call.1} parent=1 // loop_header_branch
      %17 = sbr.rel (%p15) target = $region8
    $region5: #{tpu_custom_call.1} parent=1 // loop_body
      %s19 = ssub.s32 %s14, 1
      %s20 = ssub.s32 %s14, 2
      %s21 = sadd.s32 %s14, 1
      %s22 = ssub.s32 %s14, %s21
      %p23 = scmp.eq.s32.totalorder %s22, 0
      %s25 = sadd.s32 %s24, 1
      %s26 = scalar_select %p23, %s24, %s25
      %p29 = pneg %p23
      %p30 = scmp.eq.s32.totalorder %s14, 1
      %p31 = por %p29, %p30
      %p32 = scmp.ne.s32.totalorder %s24, %s27
      %p33 = scmp.eq.s32.totalorder %s14, 0
      %p34 = por %p32, %p33
      %p35 = scmp.ne.s32.totalorder %s24, %s27
      %p36 = scmp.eq.s32.totalorder %s19, 1
      %p37 = por %p35, %p36
      %p38 = scmp.ne.s32.totalorder %s27, %s28
      %p39 = scmp.eq.s32.totalorder %s19, 0
      %p40 = por %p38, %p39
      %p41 = scmp.ne.s32.totalorder %s27, %s28
      %p42 = scmp.eq.s32.totalorder %s20, 1
      %p43 = por %p41, %p42
      %p45 = scmp.ne.s32.totalorder %s28, %s44
      %p46 = scmp.eq.s32.totalorder %s20, 0
      %p47 = por %p45, %p46
      %s49 = sadd.s32 %s48, 1
      %p52 = scmp.eq.s32.totalorder %s14, 1
      %p53 = scmp.ne.s32.totalorder %s48, %s50
      %p54 = scmp.eq.s32.totalorder %s14, 0
      %p55 = por %p53, %p54
      %p56 = scmp.ne.s32.totalorder %s48, %s50
      %p57 = scmp.eq.s32.totalorder %s19, 1
      %p58 = por %p56, %p57
      %p59 = scmp.ne.s32.totalorder %s50, %s51
      %p60 = scmp.eq.s32.totalorder %s19, 0
      %p61 = por %p59, %p60
      %p62 = scmp.ne.s32.totalorder %s50, %s51
      %p63 = scmp.eq.s32.totalorder %s20, 1
      %p64 = por %p62, %p63
      %p66 = scmp.ne.s32.totalorder %s51, %s65
      %p67 = scmp.eq.s32.totalorder %s20, 0
      %p68 = por %p66, %p67
      %s70 = sadd.s32 %s69, 1
      %p73 = scmp.eq.s32.totalorder %s14, 1
      %p74 = scmp.ne.s32.totalorder %s69, %s71
      %p75 = scmp.eq.s32.totalorder %s14, 0
      %p76 = por %p74, %p75
      %p77 = scmp.ne.s32.totalorder %s69, %s71
      %p78 = scmp.eq.s32.totalorder %s19, 1
      %p79 = por %p77, %p78
      %p80 = scmp.ne.s32.totalorder %s71, %s72
      %p81 = scmp.eq.s32.totalorder %s19, 0
      %p82 = por %p80, %p81
      %p83 = scmp.ne.s32.totalorder %s71, %s72
      %p84 = scmp.eq.s32.totalorder %s20, 1
      %p85 = por %p83, %p84
      %p87 = scmp.ne.s32.totalorder %s72, %s86
      %p88 = scmp.eq.s32.totalorder %s20, 0
      %p89 = por %p87, %p88
      %s91 = sadd.s32 %s90, 1
      %p94 = scmp.eq.s32.totalorder %s14, 1
      %p95 = scmp.ne.s32.totalorder %s90, %s92
      %p96 = scmp.eq.s32.totalorder %s14, 0
      %p97 = por %p95, %p96
      %p98 = scmp.ne.s32.totalorder %s90, %s92
      %p99 = scmp.eq.s32.totalorder %s19, 1
      %p100 = por %p98, %p99
      %p101 = scmp.ne.s32.totalorder %s92, %s93
      %p102 = scmp.eq.s32.totalorder %s19, 0
      %p103 = por %p101, %p102
      %p104 = scmp.ne.s32.totalorder %s92, %s93
      %p105 = scmp.eq.s32.totalorder %s20, 1
      %p106 = por %p104, %p105
      %p108 = scmp.ne.s32.totalorder %s93, %s107
      %p109 = scmp.eq.s32.totalorder %s20, 0
      %p110 = por %p108, %p109
      %s112 = sadd.s32 %s111, 1
      %p115 = scmp.eq.s32.totalorder %s14, 1
      %p116 = scmp.ne.s32.totalorder %s111, %s113
      %p117 = scmp.eq.s32.totalorder %s14, 0
      %p118 = por %p116, %p117
      %p119 = scmp.ne.s32.totalorder %s111, %s113
      %p120 = scmp.eq.s32.totalorder %s19, 1
      %p121 = por %p119, %p120
      %p122 = scmp.ne.s32.totalorder %s113, %s114
      %p123 = scmp.eq.s32.totalorder %s19, 0
      %p124 = por %p122, %p123
      %p125 = scmp.ne.s32.totalorder %s113, %s114
      %p126 = scmp.eq.s32.totalorder %s20, 1
      %p127 = por %p125, %p126
      %p129 = scmp.ne.s32.totalorder %s114, %s128
      %p130 = scmp.eq.s32.totalorder %s20, 0
      %p131 = por %p129, %p130
      %s132 = ssub.s32 %s14, %s21
      %p133 = scmp.eq.s32.totalorder %s132, 0
      %s135 = sadd.s32 %s134, 1
      %s136 = scalar_select %p133, %s134, %s135
      %p139 = pneg %p133
      %p140 = scmp.eq.s32.totalorder %s14, 1
      %p141 = por %p139, %p140
      %p142 = scmp.ne.s32.totalorder %s134, %s137
      %p143 = scmp.eq.s32.totalorder %s14, 0
      %p144 = por %p142, %p143
      %p145 = scmp.ne.s32.totalorder %s134, %s137
      %p146 = scmp.eq.s32.totalorder %s19, 1
      %p147 = por %p145, %p146
      %p148 = scmp.ne.s32.totalorder %s137, %s138
      %p149 = scmp.eq.s32.totalorder %s19, 0
      %p150 = por %p148, %p149
      %p151 = scmp.ne.s32.totalorder %s137, %s138
      %p152 = scmp.eq.s32.totalorder %s20, 1
      %p153 = por %p151, %p152
      %p155 = scmp.ne.s32.totalorder %s138, %s154
      %p156 = scmp.eq.s32.totalorder %s20, 0
      %p157 = por %p155, %p156
      %p158 = scmp.le.s32.totalorder 1, %s14
      %p159 = scmp.lt.s32.totalorder %s14, 3
      %p160 = pnand %p158, %p159
      %p161 = pneg %p160
      // Predicated region
      $region9: #{tpu_custom_call.1} parent=5 // pred_check
        _
      $region10: #{tpu_custom_call.1} parent=5 // pred_check_branch
        %163 = sbr.rel (%p160) target = $region12
      $region11: #{tpu_custom_call.1} parent=5 // pred_region
        %s164 = ssub.s32 %s14, 1
        // Predicated region
        $region13: #{tpu_custom_call.1} parent=11 // pred_check
          %p165 = pneg %p61
        $region14: #{tpu_custom_call.1} parent=11 // pred_check_branch
          %167 = sbr.rel (%p165) target = $region16
        $region15: #{tpu_custom_call.1} parent=11 // pred_region
          _
        $region16: #{tpu_custom_call.1} parent=11 // pred_fallthru
          _
        // Predicated region
        $region17: #{tpu_custom_call.1} parent=11 // pred_check
          %p168 = pneg %p82
        $region18: #{tpu_custom_call.1} parent=11 // pred_check_branch
          %170 = sbr.rel (%p168) target = $region20
        $region19: #{tpu_custom_call.1} parent=11 // pred_region
          _
        $region20: #{tpu_custom_call.1} parent=11 // pred_fallthru
          _
        // Predicated region
        $region21: #{tpu_custom_call.1} parent=11 // pred_check
          %p171 = pneg %p103
        $region22: #{tpu_custom_call.1} parent=11 // pred_check_branch
          %173 = sbr.rel (%p171) target = $region24
        $region23: #{tpu_custom_call.1} parent=11 // pred_region
          _
        $region24: #{tpu_custom_call.1} parent=11 // pred_fallthru
          _
        // Predicated region
        $region25: #{tpu_custom_call.1} parent=11 // pred_check
          %p174 = pneg %p124
        $region26: #{tpu_custom_call.1} parent=11 // pred_check_branch
          %176 = sbr.rel (%p174) target = $region28
        $region27: #{tpu_custom_call.1} parent=11 // pred_region
          _
        $region28: #{tpu_custom_call.1} parent=11 // pred_fallthru
          _
      $region12: #{tpu_custom_call.1} parent=5 // pred_fallthru
        _
      %p177 = scmp.lt.s32.totalorder %s14, 2
      // Predicated region
      $region29: #{tpu_custom_call.1} parent=5 // pred_check
        %p178 = pneg %p177
      $region30: #{tpu_custom_call.1} parent=5 // pred_check_branch
        %180 = sbr.rel (%p178) target = $region32
      $region31: #{tpu_custom_call.1} parent=5 // pred_region
        // Predicated region
        $region33: #{tpu_custom_call.1} parent=31 // pred_check
          %p181 = pneg %p34
        $region34: #{tpu_custom_call.1} parent=31 // pred_check_branch
          %183 = sbr.rel (%p181) target = $region36
        $region35: #{tpu_custom_call.1} parent=31 // pred_region
          %p184 = scmp.lt.s32.totalorder %s14, 1
          %s185 = scalar_select %p184, %s14, 1
          %s186 = smul.addr %s185, 4
          %s187 = smul.addr %s186, 4
          %s188 = scalar_lea.vmem %s0, %s187
        $region36: #{tpu_custom_call.1} parent=31 // pred_fallthru
          _
      $region32: #{tpu_custom_call.1} parent=5 // pred_fallthru
        _
      %p189 = scmp.le.s32.totalorder 1, %s14
      %p190 = scmp.lt.s32.totalorder %s14, 3
      %p191 = pnand %p189, %p190
      %p192 = pneg %p191
      // Predicated region
      $region37: #{tpu_custom_call.1} parent=5 // pred_check
        _
      $region38: #{tpu_custom_call.1} parent=5 // pred_check_branch
        %194 = sbr.rel (%p191) target = $region40
      $region39: #{tpu_custom_call.1} parent=5 // pred_region
        %s195 = ssub.s32 %s14, 1
        %p196 = scmp.lt.s32.totalorder %s19, 1
        %s197 = scalar_select %p196, %s19, 1
        %s198 = smul.addr %s197, 4
        %s199 = smul.addr %s198, 4
        %s200 = scalar_lea.vmem %s0, %s199
        %p201 = pneg %p40
        %p202 = pneg %p37
        %p203 = pneg %p61
        %p204 = pneg %p58
        %p205 = pneg %p82
        %p206 = pneg %p79
        %p207 = pneg %p103
        %p208 = pneg %p100
        %p209 = pneg %p124
        %p210 = pneg %p121
        %p211 = pneg %p150
        %p212 = pneg %p147
        %s213 = sand.u32 %s137, 1
        %s214 = scalar_lea.sflag [#allocation3], %s213
        %s215 = sand.u32 %s137, 1
        %s216 = smul.addr %s215, 24
        %s217 = scalar_lea.vmem [#allocation2], %s216
        %p218 = scmp.lt.s32.totalorder %s19, 1
        %s219 = scalar_select %p218, %s19, 1
        %s220 = smul.addr %s219, 4
        %s221 = smul.addr %s220, 4
        %s222 = scalar_lea.vmem %s0, %s221
        %v224 = vld [vmem:[%s222] sm:$0x77]
        %v225 = vld [vmem:[%s222 + $0x8] sm:$0x7]
        %v226 = vld [vmem:[%s222 + $0x8] sm:$0x77]
        %v229 = vunpack.c.l.b16 %v224
        %v230 = vunpack.c.h.b16 %v224
        %v231 = vunpack.c.l.b16 %v225
        %v232 = vpack.c.b16 %v229, %v229
        %v233 = vpack.c.b16 %v230, %v230
        %v234 = vpack.c.b16 %v231, %v231
        %v236 = vunpack.c.l.b16 %v226
        %v237 = vunpack.c.h.b16 %v226
        %v238 = vpack.c.b16 %v236, %v236
        %v239 = vpack.c.b16 %v237, %v237
        %v240 = vrot.slane %v232, 5
        %v241 = vrot.slane %v233, 5
        %v242 = vrot.slane %v238, 5
        %v243 = vrot.slane %v239, 5
        %244 = vrot.lane.b32.xlu0 %v240, 127
        %v245 = vpop.permute.xlu0 %244
        %246 = vrot.lane.b32.xlu0 %v241, 127
        %v247 = vpop.permute.xlu0 %246
        %248 = vrot.lane.b32.xlu0 %v242, 127
        %v249 = vpop.permute.xlu0 %248
        %250 = vrot.lane.b32.xlu0 %v243, 127
        %v251 = vpop.permute.xlu0 %250
        %vm252 = vcmask 1039360
        %v253 = vsel %vm252, %v245, %v247
        %v254 = vsel %vm252, %v247, %v249
        %v255 = vsel %vm252, %v249, %v251
        %v256 = vrot.slane %v232, 2
        %v257 = vrot.slane %v233, 2
        %v258 = vrot.slane %v238, 2
        %v259 = vrot.slane %v239, 2
        %260 = vrot.lane.b32.xlu0 %v256, 126
        %v261 = vpop.permute.xlu0 %260
        %262 = vrot.lane.b32.xlu0 %v257, 126
        %v263 = vpop.permute.xlu0 %262
        %264 = vrot.lane.b32.xlu0 %v258, 126
        %v265 = vpop.permute.xlu0 %264
        %266 = vrot.lane.b32.xlu0 %v259, 126
        %v267 = vpop.permute.xlu0 %266
        %vm268 = vcmask 1031168
        %v269 = vsel %vm268, %v261, %v263
        %v270 = vsel %vm268, %v263, %v265
        %v271 = vsel %vm268, %v265, %v267
        %v272 = vrot.slane %v232, 7
        %v273 = vrot.slane %v233, 7
        %v274 = vrot.slane %v238, 7
        %v275 = vrot.slane %v239, 7
        %276 = vrot.lane.b32.xlu0 %v272, 104
        %v277 = vpop.permute.xlu0 %276
        %278 = vrot.lane.b32.xlu0 %v273, 104
        %v279 = vpop.permute.xlu0 %278
        %280 = vrot.lane.b32.xlu0 %v274, 104
        %v281 = vpop.permute.xlu0 %280
        %282 = vrot.lane.b32.xlu0 %v275, 104
        %v283 = vpop.permute.xlu0 %282
        %vm284 = vcmask 850944
        %v285 = vsel %vm284, %v277, %v279
        %v286 = vsel %vm284, %v279, %v281
        %v287 = vsel %vm284, %v281, %v283
        %288 = vrot.lane.b32.xlu0 %v232, 103
        %v289 = vpop.permute.xlu0 %288
        %290 = vrot.lane.b32.xlu0 %v233, 103
        %v291 = vpop.permute.xlu0 %290
        %292 = vrot.lane.b32.xlu0 %v238, 103
        %v293 = vpop.permute.xlu0 %292
        %294 = vrot.lane.b32.xlu0 %v239, 103
        %v295 = vpop.permute.xlu0 %294
        %vm296 = vcmask 842752
        %v297 = vsel %vm296, %v289, %v291
        %v298 = vsel %vm296, %v291, %v293
        %v299 = vsel %vm296, %v293, %v295
        %v300 = vrot.slane %v232, 1
        %v301 = vrot.slane %v233, 1
        %v302 = vrot.slane %v238, 1
        %v303 = vrot.slane %v239, 1
        %304 = vrot.lane.b32.xlu0 %v300, 102
        %v305 = vpop.permute.xlu0 %304
        %306 = vrot.lane.b32.xlu0 %v301, 102
        %v307 = vpop.permute.xlu0 %306
        %308 = vrot.lane.b32.xlu0 %v302, 102
        %v309 = vpop.permute.xlu0 %308
        %310 = vrot.lane.b32.xlu0 %v303, 102
        %v311 = vpop.permute.xlu0 %310
        %vm312 = vcmask 834560
        %v313 = vsel %vm312, %v305, %v307
        %v314 = vsel %vm312, %v307, %v309
        %v315 = vsel %vm312, %v309, %v311
        %v316 = vrot.slane %v232, 6
        %v317 = vrot.slane %v233, 6
        %v318 = vrot.slane %v238, 6
        %v319 = vrot.slane %v239, 6
        %320 = vrot.lane.b32.xlu0 %v316, 80
        %v321 = vpop.permute.xlu0 %320
        %322 = vrot.lane.b32.xlu0 %v317, 80
        %v323 = vpop.permute.xlu0 %322
        %324 = vrot.lane.b32.xlu0 %v318, 80
        %v325 = vpop.permute.xlu0 %324
        %326 = vrot.lane.b32.xlu0 %v319, 80
        %v327 = vpop.permute.xlu0 %326
        %vm328 = vcmask 654336
        %v329 = vsel %vm328, %v321, %v323
        %v330 = vsel %vm328, %v323, %v325
        %v331 = vsel %vm328, %v325, %v327
        %v332 = vrot.slane %v232, 3
        %v333 = vrot.slane %v233, 3
        %v334 = vrot.slane %v238, 3
        %v335 = vrot.slane %v239, 3
        %336 = vrot.lane.b32.xlu0 %v332, 79
        %v337 = vpop.permute.xlu0 %336
        %338 = vrot.lane.b32.xlu0 %v333, 79
        %v339 = vpop.permute.xlu0 %338
        %340 = vrot.lane.b32.xlu0 %v334, 79
        %v341 = vpop.permute.xlu0 %340
        %342 = vrot.lane.b32.xlu0 %v335, 79
        %v343 = vpop.permute.xlu0 %342
        %vm344 = vcmask 646144
        %v345 = vsel %vm344, %v337, %v339
        %v346 = vsel %vm344, %v339, %v341
        %v347 = vsel %vm344, %v341, %v343
        %348 = vrot.lane.b32.xlu0 %v232, 78
        %v349 = vpop.permute.xlu0 %348
        %350 = vrot.lane.b32.xlu0 %v233, 78
        %v351 = vpop.permute.xlu0 %350
        %352 = vrot.lane.b32.xlu0 %v238, 78
        %v353 = vpop.permute.xlu0 %352
        %354 = vrot.lane.b32.xlu0 %v239, 78
        %v355 = vpop.permute.xlu0 %354
        %vm356 = vcmask 637952
        %v357 = vsel %vm356, %v349, %v351
        %v358 = vsel %vm356, %v351, %v353
        %v359 = vsel %vm356, %v353, %v355
        %vm360 = vcmask 1042432
        %v363 = vsel %vm360, %v232, %v253
        %v366 = vsel %vm360, %v233, %v254
        %v369 = vsel %vm360, %v234, %v255
        %vm370 = vcmask 1045504
        %v372 = vsel %vm370, %v363, %v269
        %v375 = vsel %vm370, %v366, %v270
        %v378 = vsel %vm370, %v369, %v271
        %vm380 = vcmask 1040384
        %v382 = vsel %vm380, %v269, %v285
        %v384 = vsel %vm380, %v270, %v286
        %v386 = vsel %vm380, %v271, %v287
        %vm387 = vcmask 1043456
        %v389 = vsel %vm387, %v382, %v297
        %v391 = vsel %vm387, %v384, %v298
        %v393 = vsel %vm387, %v386, %v299
        %vm394 = vcmask 1046528
        %v396 = vsel %vm394, %v389, %v313
        %v399 = vsel %vm394, %v391, %v314
        %v402 = vsel %vm394, %v393, %v315
        %vm404 = vcmask 1041408
        %v406 = vsel %vm404, %v313, %v329
        %v408 = vsel %vm404, %v314, %v330
        %v410 = vsel %vm404, %v315, %v331
        %vm411 = vcmask 1044480
        %v413 = vsel %vm411, %v406, %v345
        %v416 = vsel %vm411, %v408, %v346
        %v419 = vsel %vm411, %v410, %v347
        %v421 = vld [vmem:[%s1] sm:$0xf]
        %v422 = vld [vmem:[%s2] sm:$0xff]
        %424 = vset.pattern.permute.xlu0 0
        %425 = vperm.xlu0 %424, %v422
        %v426 = vpop.permute.xlu0 %425
        %vm428 = vcmask 441344
        %v430 = vsel %vm428, %v421, 0
        %v433 = vsel %vm360, %v357, 0
        %v436 = vsel %vm360, %v358, 0
        %v439 = vsel %vm360, %v359, 0
        %441 = vmatprep.subr.bf16.mxu0 %v375
        %442 = vmatpush1.bf16.msra.mxu0 %v372
        %443 = vmatprep.subr.bf16.mxu0 %v399
        %444 = vmatpush1.bf16.msra.mxu0 %v396
        %445 = vmatprep.subr.bf16.mxu0 %v416
        %446 = vmatpush1.bf16.msra.mxu0 %v413
        %447 = vmatprep.subr.bf16.mxu0 %v436
        %448 = vmatpush1.bf16.msra.mxu0 %v433
        %449 = vmatprep.subr.bf16.mxu0 0
        %450 = vmatpush1.bf16.msra.mxu0 0
        %451 = vmatprep.subr.bf16.mxu0 0
        %452 = vmatpush1.bf16.msra.mxu0 0
        %453 = vmatprep.subr.bf16.mxu0 0
        %454 = vmatpush1.bf16.msra.mxu0 0
        %455 = vmatprep.subr.bf16.mxu0 0
        %456 = vmatpush1.bf16.msra.mxu0 0
        %457 = vmatprep.subr.bf16.mxu0 0
        %458 = vmatpush1.bf16.msra.mxu0 0
        %459 = vmatprep.subr.bf16.mxu0 0
        %460 = vmatpush1.bf16.msra.mxu0 0
        %461 = vmatprep.subr.bf16.mxu0 0
        %462 = vmatpush1.bf16.msra.mxu0 0
        %463 = vmatprep.subr.bf16.mxu0 0
        %464 = vmatpush1.bf16.msra.mxu0 0
        %465 = vmatprep.subr.bf16.mxu0 0
        %466 = vmatpush1.bf16.msra.mxu0 0
        %467 = vmatprep.subr.bf16.mxu0 0
        %468 = vmatpush1.bf16.msra.mxu0 0
        %469 = vmatprep.subr.bf16.mxu0 0
        %470 = vmatpush1.bf16.msra.mxu0 0
        %471 = vmatprep.subr.bf16.mxu0 0
        %472 = vmatpush1.bf16.msra.mxu0 0
        %473 = vmatprep.mubr.bf16.mxu0 0
        %474 = vmatmul.mubr.bf16.gmra.mrb[0].mxu0 %v430
        %v475 = vpop.f32.mrb[0].mxu0
        %v476 = vadd.f32 %v426, %v475
        %v477 = vpop.f32.mrb[0].mxu0
        %v478 = vadd.f32 %v426, %v477
        %v479 = vpop.f32.mrb[0].mxu0
        %v480 = vpop.f32.mrb[0].mxu0
        %481 = vdwg.mxu0
        %482 = vmatprep.subr.bf16.mxu0 0
        %483 = vmatpush1.bf16.msra.mxu0 %v378
        %484 = vmatprep.subr.bf16.mxu0 0
        %485 = vmatpush1.bf16.msra.mxu0 %v402
        %486 = vmatprep.subr.bf16.mxu0 0
        %487 = vmatpush1.bf16.msra.mxu0 %v419
        %488 = vmatprep.subr.bf16.mxu0 0
        %489 = vmatpush1.bf16.msra.mxu0 %v439
        %490 = vmatprep.subr.bf16.mxu0 0
        %491 = vmatpush1.bf16.msra.mxu0 0
        %492 = vmatprep.subr.bf16.mxu0 0
        %493 = vmatpush1.bf16.msra.mxu0 0
        %494 = vmatprep.subr.bf16.mxu0 0
        %495 = vmatpush1.bf16.msra.mxu0 0
        %496 = vmatprep.subr.bf16.mxu0 0
        %497 = vmatpush1.bf16.msra.mxu0 0
        %498 = vmatprep.subr.bf16.mxu0 0
        %499 = vmatpush1.bf16.msra.mxu0 0
        %500 = vmatprep.subr.bf16.mxu0 0
        %501 = vmatpush1.bf16.msra.mxu0 0
        %502 = vmatprep.subr.bf16.mxu0 0
        %503 = vmatpush1.bf16.msra.mxu0 0
        %504 = vmatprep.subr.bf16.mxu0 0
        %505 = vmatpush1.bf16.msra.mxu0 0
        %506 = vmatprep.subr.bf16.mxu0 0
        %507 = vmatpush1.bf16.msra.mxu0 0
        %508 = vmatprep.subr.bf16.mxu0 0
        %509 = vmatpush1.bf16.msra.mxu0 0
        %510 = vmatprep.subr.bf16.mxu0 0
        %511 = vmatpush1.bf16.msra.mxu0 0
        %512 = vmatprep.subr.bf16.mxu0 0
        %513 = vmatpush1.bf16.msra.mxu0 0
        %514 = vmatprep.mubr.bf16.mxu0 0
        %515 = vmatmul.mubr.bf16.gmra.mrb[0].mxu0 %v430
        %v516 = vpop.f32.mrb[0].mxu0
        %v517 = vadd.f32 %v426, %v516
        %v518 = vpop.f32.mrb[0].mxu0
        %v519 = vpop.f32.mrb[0].mxu0
        %v520 = vpop.f32.mrb[0].mxu0
        %521 = vdwg.mxu0
        %522 = vst [vmem:[%s217] sm:$0xff] %v476
        %523 = vst [vmem:[%s217 + $0x8] sm:$0xff] %v478
        %524 = vst [vmem:[%s217 + $0x10] sm:$0xff] %v517
        %s525 = sand.u32 %s137, 1
        %s526 = scalar_lea.sflag [#allocation3], %s525
        %s527 = sand.u32 %s137, 1
        %s528 = smul.addr %s527, 24
        %s529 = scalar_lea.vmem [#allocation2], %s528
        // Predicated region
        $region41: #{tpu_custom_call.1} parent=39 // pred_check
          %p530 = pneg %p147
        $region42: #{tpu_custom_call.1} parent=39 // pred_check_branch
          %532 = sbr.rel (%p530) target = $region44
        $region43: #{tpu_custom_call.1} parent=39 // pred_region
          %s534 = ssub.s32 384, 384
          %535 = vsyncadd %s526, %s534
          %s536 = smul.addr %s19, 3
          %s537 = smul.addr %s536, 128
          %s538 = scalar_lea.hbm %s5, %s537
          %s540 = sshll.u32 %s529, 4
          %s541 = int_to_ptr.vmem [resolvable:$true] %s540
          %543 = dma.vmem_to_hbm [thread:$0]  %s541, 384, %s538, %s526
        $region44: #{tpu_custom_call.1} parent=39 // pred_fallthru
          _
      $region40: #{tpu_custom_call.1} parent=5 // pred_fallthru
        _
      %p544 = scmp.le.s32.totalorder 2, %s14
      // Predicated region
      $region45: #{tpu_custom_call.1} parent=5 // pred_check
        %p545 = pneg %p544
      $region46: #{tpu_custom_call.1} parent=5 // pred_check_branch
        %547 = sbr.rel (%p545) target = $region48
      $region47: #{tpu_custom_call.1} parent=5 // pred_region
        %s548 = ssub.s32 %s14, 2
        // Predicated region
        $region49: #{tpu_custom_call.1} parent=47 // pred_check
          %p549 = pneg %p153
        $region50: #{tpu_custom_call.1} parent=47 // pred_check_branch
          %551 = sbr.rel (%p549) target = $region52
        $region51: #{tpu_custom_call.1} parent=47 // pred_region
          %s552 = sand.u32 %s138, 1
          %s553 = scalar_lea.sflag [#allocation3], %s552
          %s554 = sand.u32 %s138, 1
          %s555 = smul.addr %s554, 24
          %s556 = scalar_lea.vmem [#allocation2], %s555
          %557 = dma.done %s553, 384
        $region52: #{tpu_custom_call.1} parent=47 // pred_fallthru
          _
      $region48: #{tpu_custom_call.1} parent=5 // pred_fallthru
        _
    $region6: #{tpu_custom_call.1} parent=1 // loop_footer
      %s18 = sadd.s32 1, %s14
    $region7: #{tpu_custom_call.1} parent=1 // loop_footer_branch
      %13 = sbr.rel target = $region3
    $region8: #{tpu_custom_call.1} parent=1 // loop_exit
      _
    %558 = vsyncpa [#allocation3], 1
    %s559 = scalar_lea.sflag [#allocation3], 1
    %560 = vsyncpa %s559, 1

</llo_original>
